<compile_context>
chip_gen: v6e
topology: v6e:2x2x1
jax: 0.10.0
libtpu: 0.0.40
codegen_flags: <defaults>
</compile_context>

<pallas_src>
import functools

import jax
import jax.numpy as jnp
from jax import lax
from jax.experimental import pallas as pl
from jax.experimental.pallas import tpu as pltpu


def lstm_encoder_kernel(x_ref,           # (Ts*Bp, E)   this chunk's inputs, time-major
                        wih_ref,         # (E, 4H)      pre-transposed input->gates weights
                        whh_ref,         # (H, 4H)      pre-transposed hidden->gates weights
                        b_ref,           # (1, 4H)      b_ih + b_hh folded, f32
                        h_ref, c_ref,    # (Bp, H)      resident carry / final outputs, f32
                        xg_scr,          # (Ts*Bp, 4H)  VMEM scratch: projected gates, f32
                        *, ts, bp, hidden):
    H = hidden

    # First time-chunk: zero-init the resident h/c carry.  Output blocks stay in VMEM across the
    # whole time axis because their block index is constant (accumulator pattern).
    @pl.when(pl.program_id(0) == 0)
    def _():
        h_ref[...] = jnp.zeros_like(h_ref)
        c_ref[...] = jnp.zeros_like(c_ref)

    # (1) One fused MXU projection for all Ts timesteps of this chunk (M = Ts*Bp rows),
    #     f32 accumulation, both biases folded in once.
    xg_scr[...] = (
        jnp.dot(x_ref[...], wih_ref[...], preferred_element_type=jnp.float32)
        + b_ref[...]
    )

    whh = whh_ref[...]   # keep resident across the recurrence

    def step(s, carry):
        h, c = carry
        row0 = pl.multiple_of(s * bp, 8)                     # 8-aligned sublane start
        gates = xg_scr[pl.ds(row0, bp), :] + jnp.dot(
            h.astype(whh.dtype), whh, preferred_element_type=jnp.float32)
        # One full-width (Bp, 4H) sigmoid via EUP tanh (no VPU divide on the critical path).
        # PyTorch gate order along the 4H axis: i | f | g | o.
        sig = 0.5 * jnp.tanh(0.5 * gates) + 0.5
        i = sig[:, 0 * H:1 * H]
        f = sig[:, 1 * H:2 * H]
        o = sig[:, 3 * H:4 * H]
        g = jnp.tanh(gates[:, 2 * H:3 * H])
        c_new = f * c + i * g
        h_new = o * jnp.tanh(c_new)
        return h_new, c_new

    h_fin, c_fin = lax.fori_loop(0, ts, step, (h_ref[...], c_ref[...]),
                                 unroll=min(ts, 8))
    h_ref[...] = h_fin
    c_ref[...] = c_fin


def _largest_divisor_at_most(n, cap):
    best = 1
    for d in range(1, n + 1):
        if n % d == 0 and d <= cap:
            best = d
    return best


def encoder_forward(src, params, hidden_dim, *, time_chunk=None,
                    matmul_dtype=jnp.float32):
    """Pallas implementation of Encoder.forward(src) -> (hidden, cell)."""
    B, S, E = src.shape
    H = hidden_dim
    Bp = ((B + 7) // 8) * 8                 # pad batch to a full 8-row sublane tile

    # ---- choose time-chunk length Ts (must divide S: time padding would change the LSTM) ----
    x_isz = jnp.dtype(matmul_dtype).itemsize
    budget = 8 * 1024 * 1024                # per-chunk VMEM budget, safe on v5e/v6e/v7x
    per_step = Bp * (2 * E * x_isz + 4 * H * 4)   # 2x x (double-buffered) + f32 gate scratch
    cap = max(1, budget // max(per_step, 1))
    if time_chunk is not None:
        cap = min(cap, time_chunk)
    Ts = _largest_divisor_at_most(S, cap)
    n_chunks = S // Ts

    # ---- wrapper-side layout plumbing (kept out of the kernel) ----
    wih = params["w_ih"].T.astype(matmul_dtype)                              # (E, 4H)
    whh = params["w_hh"].T.astype(matmul_dtype)                              # (H, 4H)
    bias = (params["b_ih"] + params["b_hh"])[None, :].astype(jnp.float32)    # (1, 4H)

    x = jnp.transpose(src, (1, 0, 2))                        # (S, B, E) time-major
    if Bp != B:
        x = jnp.pad(x, ((0, 0), (0, Bp - B), (0, 0)))
    x = x.reshape(S * Bp, E).astype(matmul_dtype)

    # ---- explicit VMEM budget for this block configuration ----
    w_isz = jnp.dtype(matmul_dtype).itemsize
    vmem_needed = (2 * Ts * Bp * E * x_isz                   # x chunk, double-buffered
                   + Ts * Bp * 4 * H * 4                     # f32 gate scratch
                   + 2 * (E * 4 * H + H * 4 * H) * w_isz     # weights (double-buffered)
                   + 2 * 4 * H * 4                           # bias
                   + 2 * 2 * Bp * H * 4)                     # h/c outputs
    vmem_limit = int(min(32 * 1024 * 1024, max(4 * 1024 * 1024, 2 * vmem_needed)))

    flops = 2 * S * Bp * 4 * H * (E + H)
    transcendentals = S * Bp * (4 * H + 2 * H)
    bytes_accessed = (S * Bp * E * x_isz + (E + H) * 4 * H * w_isz
                      + 4 * H * 4 + 2 * Bp * H * 4)

    kernel = functools.partial(lstm_encoder_kernel, ts=Ts, bp=Bp, hidden=H)

    h_pad, c_pad = pl.pallas_call(
        kernel,
        out_shape=(
            jax.ShapeDtypeStruct((Bp, H), jnp.float32),
            jax.ShapeDtypeStruct((Bp, H), jnp.float32),
        ),
        grid_spec=pltpu.PrefetchScalarGridSpec(
            num_scalar_prefetch=0,
            grid=(n_chunks,),
            in_specs=[
                pl.BlockSpec((Ts * Bp, E), lambda t: (t, 0)),    # x: streamed per time chunk
                pl.BlockSpec((E, 4 * H), lambda t: (0, 0)),      # W_ih^T (fetched once)
                pl.BlockSpec((H, 4 * H), lambda t: (0, 0)),      # W_hh^T (fetched once)
                pl.BlockSpec((1, 4 * H), lambda t: (0, 0)),      # folded bias
            ],
            out_specs=[
                pl.BlockSpec((Bp, H), lambda t: (0, 0)),         # resident h carry
                pl.BlockSpec((Bp, H), lambda t: (0, 0)),         # resident c carry
            ],
            scratch_shapes=[pltpu.VMEM((Ts * Bp, 4 * H), jnp.float32)],
        ),
        compiler_params=pltpu.CompilerParams(
            dimension_semantics=("arbitrary",),                  # sequential recurrence over time
            vmem_limit_bytes=vmem_limit),
        cost_estimate=pl.CostEstimate(
            flops=flops, transcendentals=transcendentals,
            bytes_accessed=bytes_accessed),
    )(x, wih, whh, bias)

    hidden = h_pad[:B][None]    # (1, B, H) — matches PyTorch LSTM's (num_layers, B, H)
    cell = c_pad[:B][None]
    return hidden, cell


def reference_encoder(src, params):
    """Pure-JAX reference of the PyTorch Encoder forward."""
    B, S, E = src.shape
    H = params["w_hh"].shape[1]
    wih, whh = params["w_ih"], params["w_hh"]
    bih, bhh = params["b_ih"], params["b_hh"]

    def step(carry, x_t):
        h, c = carry
        gates = x_t @ wih.T + bih + h @ whh.T + bhh
        i, f, g, o = jnp.split(gates, 4, axis=-1)
        i = 1.0 / (1.0 + jnp.exp(-i))
        f = 1.0 / (1.0 + jnp.exp(-f))
        g = jnp.tanh(g)
        o = 1.0 / (1.0 + jnp.exp(-o))
        c = f * c + i * g
        h = o * jnp.tanh(c)
        return (h, c), None

    h0 = jnp.zeros((B, H), jnp.float32)
    c0 = jnp.zeros((B, H), jnp.float32)
    (h, c), _ = lax.scan(step, (h0, c0), jnp.transpose(src, (1, 0, 2)))
    return h[None], c[None]


if __name__ == "__main__":
    B, S, E, H = 2, 8, 32, 32

    key = jax.random.PRNGKey(0)
    keys = jax.random.split(key, 5)

    src = jax.random.normal(keys[0], (B, S, E), dtype=jnp.float32)

    bound = 1.0 / (H ** 0.5)   # PyTorch LSTM default init range
    params = {
        "w_ih": jax.random.uniform(keys[1], (4 * H, E), jnp.float32, -bound, bound),
        "w_hh": jax.random.uniform(keys[2], (4 * H, H), jnp.float32, -bound, bound),
        "b_ih": jax.random.uniform(keys[3], (4 * H,), jnp.float32, -bound, bound),
        "b_hh": jax.random.uniform(keys[4], (4 * H,), jnp.float32, -bound, bound),
    }

    ref_h, ref_c = reference_encoder(src, params)

    # f32 matmuls (default): time_chunk=4 -> 2 pipelined time chunks, exercising the h/c carry.
    hidden, cell = encoder_forward(src, params, hidden_dim=H, time_chunk=4)
    hidden = jax.block_until_ready(hidden)
    cell = jax.block_until_ready(cell)
    assert hidden.shape == (1, B, H) and cell.shape == (1, B, H)
    assert jnp.allclose(hidden, ref_h, atol=1e-4, rtol=1e-4)
    assert jnp.allclose(cell, ref_c, atol=1e-4, rtol=1e-4)

    # bf16 matmul operands (v5e/v6e/v7x MXU fast path), f32 accumulation / state.
    hidden_bf, cell_bf = encoder_forward(src, params, hidden_dim=H, time_chunk=4,
                                         matmul_dtype=jnp.bfloat16)
    hidden_bf = jax.block_until_ready(hidden_bf)
    cell_bf = jax.block_until_ready(cell_bf)
    assert jnp.allclose(hidden_bf, ref_h, atol=5e-2, rtol=5e-2)
    assert jnp.allclose(cell_bf, ref_c, atol=5e-2, rtol=5e-2)

    print("KERNEL_OK")
</pallas_src>

<mosaic_0001>
module attributes {stable_mosaic.version = 11 : i64} {
  func.func @lstm_encoder_kernel(%arg0: i32, %arg1: memref<32x32xf32, #tpu.memory_space<vmem>>, %arg2: memref<32x128xf32, #tpu.memory_space<vmem>>, %arg3: memref<32x128xf32, #tpu.memory_space<vmem>>, %arg4: memref<1x128xf32, #tpu.memory_space<vmem>>, %arg5: memref<8x32xf32, #tpu.memory_space<vmem>>, %arg6: memref<8x32xf32, #tpu.memory_space<vmem>>, %arg7: memref<32x128xf32, #tpu.memory_space<vmem>>) attributes {dimension_semantics = [#tpu.dimension_semantics<arbitrary>], iteration_bounds = array<i64: 2>, scalar_prefetch = 0 : i64, scratch_operands = 1 : i64, tpu.core_type = #tpu.core_type<tc>, window_params = [{transform_indices = @transform_0, window_bounds = array<i64: 32, 32>}, {pipeline_mode = #tpu.pipeline_mode<synchronous>, transform_indices = @transform_1, window_bounds = array<i64: 32, 128>}, {pipeline_mode = #tpu.pipeline_mode<synchronous>, transform_indices = @transform_2, window_bounds = array<i64: 32, 128>}, {pipeline_mode = #tpu.pipeline_mode<synchronous>, transform_indices = @transform_3, window_bounds = array<i64: 1, 128>}, {pipeline_mode = #tpu.pipeline_mode<synchronous>, transform_indices = @transform_4, window_bounds = array<i64: 8, 32>}, {pipeline_mode = #tpu.pipeline_mode<synchronous>, transform_indices = @transform_5, window_bounds = array<i64: 8, 32>}]} {
    %c0_i32 = arith.constant 0 : i32
    %0 = arith.cmpi eq, %arg0, %c0_i32 : i32
    %1 = arith.extui %0 : i1 to i32
    %c0_i32_0 = arith.constant 0 : i32
    %2 = arith.cmpi ne, %1, %c0_i32_0 : i32
    scf.if %2 {
      %cst_42 = arith.constant 0.000000e+00 : f32
      %107 = vector.broadcast %cst_42 : f32 to vector<8x32xf32>
      %c0_43 = arith.constant 0 : index
      %c0_44 = arith.constant 0 : index
      %108 = vector.load %arg5[%c0_43, %c0_44] : memref<8x32xf32, #tpu.memory_space<vmem>>, vector<8x32xf32>
      tpu.vector_store %arg5[%c0_43, %c0_44], %107 {strides = array<i32>} : memref<8x32xf32, #tpu.memory_space<vmem>>, vector<8x32xf32>,
      %cst_45 = arith.constant 0.000000e+00 : f32
      %109 = vector.broadcast %cst_45 : f32 to vector<8x32xf32>
      %c0_46 = arith.constant 0 : index
      %c0_47 = arith.constant 0 : index
      %110 = vector.load %arg6[%c0_46, %c0_47] : memref<8x32xf32, #tpu.memory_space<vmem>>, vector<8x32xf32>
      tpu.vector_store %arg6[%c0_46, %c0_47], %109 {strides = array<i32>} : memref<8x32xf32, #tpu.memory_space<vmem>>, vector<8x32xf32>,
    } else {
    }
    %c0 = arith.constant 0 : index
    %c0_1 = arith.constant 0 : index
    %3 = vector.load %arg1[%c0, %c0_1] : memref<32x32xf32, #tpu.memory_space<vmem>>, vector<32x32xf32>
    %c0_2 = arith.constant 0 : index
    %c0_3 = arith.constant 0 : index
    %4 = vector.load %arg2[%c0_2, %c0_3] : memref<32x128xf32, #tpu.memory_space<vmem>>, vector<32x128xf32>
    %cst = arith.constant dense<0.000000e+00> : vector<32x128xf32>
    %5 = tpu.matmul %3, %4, %cst {dimension_numbers = #tpu.dot_dimension_numbers<[1], [0], [0], [1], [0, 0, 1, 1], [], []>} : vector<32x32xf32>, vector<32x128xf32>, vector<32x128xf32> -> vector<32x128xf32>
    %c0_4 = arith.constant 0 : index
    %c0_5 = arith.constant 0 : index
    %6 = vector.load %arg4[%c0_4, %c0_5] : memref<1x128xf32, #tpu.memory_space<vmem>>, vector<1x128xf32>
    %7 = vector.broadcast %6 : vector<1x128xf32> to vector<32x128xf32>
    %8 = arith.addf %5, %7 : vector<32x128xf32>
    %c0_6 = arith.constant 0 : index
    %c0_7 = arith.constant 0 : index
    %9 = vector.load %arg7[%c0_6, %c0_7] : memref<32x128xf32, #tpu.memory_space<vmem>>, vector<32x128xf32>
    tpu.vector_store %arg7[%c0_6, %c0_7], %8 {strides = array<i32>} : memref<32x128xf32, #tpu.memory_space<vmem>>, vector<32x128xf32>,
    %c0_8 = arith.constant 0 : index
    %c0_9 = arith.constant 0 : index
    %10 = vector.load %arg3[%c0_8, %c0_9] : memref<32x128xf32, #tpu.memory_space<vmem>>, vector<32x128xf32>
    %c0_10 = arith.constant 0 : index
    %c0_11 = arith.constant 0 : index
    %11 = vector.load %arg5[%c0_10, %c0_11] : memref<8x32xf32, #tpu.memory_space<vmem>>, vector<8x32xf32>
    %c0_12 = arith.constant 0 : index
    %c0_13 = arith.constant 0 : index
    %12 = vector.load %arg6[%c0_12, %c0_13] : memref<8x32xf32, #tpu.memory_space<vmem>>, vector<8x32xf32>
    %c0_i32_14 = arith.constant 0 : i32
    %c8_i32 = arith.constant 8 : i32
    %13 = arith.muli %c0_i32_14, %c8_i32 : i32
    %14 = tpu.assume_multiple %13, 8 : i32
    %15 = arith.index_cast %14 : i32 to index
    %c0_15 = arith.constant 0 : index
    %16 = vector.load %arg7[%15, %c0_15] : memref<32x128xf32, #tpu.memory_space<vmem>>, vector<8x128xf32>
    %cst_16 = arith.constant dense<0.000000e+00> : vector<8x128xf32>
    %17 = tpu.matmul %11, %10, %cst_16 {dimension_numbers = #tpu.dot_dimension_numbers<[1], [0], [0], [1], [0, 0, 1, 1], [], []>} : vector<8x32xf32>, vector<32x128xf32>, vector<8x128xf32> -> vector<8x128xf32>
    %18 = arith.addf %16, %17 : vector<8x128xf32>
    %cst_17 = arith.constant 5.000000e-01 : f32
    %19 = vector.broadcast %cst_17 : f32 to vector<8x128xf32>
    %20 = arith.mulf %19, %18 : vector<8x128xf32>
    %21 = math.tanh %20 : vector<8x128xf32>
    %cst_18 = arith.constant 5.000000e-01 : f32
    %22 = vector.broadcast %cst_18 : f32 to vector<8x128xf32>
    %23 = arith.mulf %22, %21 : vector<8x128xf32>
    %cst_19 = arith.constant 5.000000e-01 : f32
    %24 = vector.broadcast %cst_19 : f32 to vector<8x128xf32>
    %25 = arith.addf %23, %24 : vector<8x128xf32>
    %26 = vector.extract_strided_slice %25 {offsets = [0, 0], sizes = [8, 32], strides = [1, 1]} : vector<8x128xf32> to vector<8x32xf32>
    %27 = vector.extract_strided_slice %25 {offsets = [0, 32], sizes = [8, 32], strides = [1, 1]} : vector<8x128xf32> to vector<8x32xf32>
    %28 = vector.extract_strided_slice %25 {offsets = [0, 96], sizes = [8, 32], strides = [1, 1]} : vector<8x128xf32> to vector<8x32xf32>
    %29 = vector.extract_strided_slice %18 {offsets = [0, 64], sizes = [8, 32], strides = [1, 1]} : vector<8x128xf32> to vector<8x32xf32>
    %30 = math.tanh %29 : vector<8x32xf32>
    %31 = arith.mulf %27, %12 : vector<8x32xf32>
    %32 = arith.mulf %26, %30 : vector<8x32xf32>
    %33 = arith.addf %31, %32 : vector<8x32xf32>
    %34 = math.tanh %33 : vector<8x32xf32>
    %35 = arith.mulf %28, %34 : vector<8x32xf32>
    %c1_i32 = arith.constant 1 : i32
    %c8_i32_20 = arith.constant 8 : i32
    %36 = arith.muli %c1_i32, %c8_i32_20 : i32
    %37 = tpu.assume_multiple %36, 8 : i32
    %38 = arith.index_cast %37 : i32 to index
    %c0_21 = arith.constant 0 : index
    %39 = vector.load %arg7[%38, %c0_21] : memref<32x128xf32, #tpu.memory_space<vmem>>, vector<8x128xf32>
    %cst_22 = arith.constant dense<0.000000e+00> : vector<8x128xf32>
    %40 = tpu.matmul %35, %10, %cst_22 {dimension_numbers = #tpu.dot_dimension_numbers<[1], [0], [0], [1], [0, 0, 1, 1], [], []>} : vector<8x32xf32>, vector<32x128xf32>, vector<8x128xf32> -> vector<8x128xf32>
    %41 = arith.addf %39, %40 : vector<8x128xf32>
    %cst_23 = arith.constant 5.000000e-01 : f32
    %42 = vector.broadcast %cst_23 : f32 to vector<8x128xf32>
    %43 = arith.mulf %42, %41 : vector<8x128xf32>
    %44 = math.tanh %43 : vector<8x128xf32>
    %cst_24 = arith.constant 5.000000e-01 : f32
    %45 = vector.broadcast %cst_24 : f32 to vector<8x128xf32>
    %46 = arith.mulf %45, %44 : vector<8x128xf32>
    %cst_25 = arith.constant 5.000000e-01 : f32
    %47 = vector.broadcast %cst_25 : f32 to vector<8x128xf32>
    %48 = arith.addf %46, %47 : vector<8x128xf32>
    %49 = vector.extract_strided_slice %48 {offsets = [0, 0], sizes = [8, 32], strides = [1, 1]} : vector<8x128xf32> to vector<8x32xf32>
    %50 = vector.extract_strided_slice %48 {offsets = [0, 32], sizes = [8, 32], strides = [1, 1]} : vector<8x128xf32> to vector<8x32xf32>
    %51 = vector.extract_strided_slice %48 {offsets = [0, 96], sizes = [8, 32], strides = [1, 1]} : vector<8x128xf32> to vector<8x32xf32>
    %52 = vector.extract_strided_slice %41 {offsets = [0, 64], sizes = [8, 32], strides = [1, 1]} : vector<8x128xf32> to vector<8x32xf32>
    %53 = math.tanh %52 : vector<8x32xf32>
    %54 = arith.mulf %50, %33 : vector<8x32xf32>
    %55 = arith.mulf %49, %53 : vector<8x32xf32>
    %56 = arith.addf %54, %55 : vector<8x32xf32>
    %57 = math.tanh %56 : vector<8x32xf32>
    %58 = arith.mulf %51, %57 : vector<8x32xf32>
    %c2_i32 = arith.constant 2 : i32
    %c8_i32_26 = arith.constant 8 : i32
    %59 = arith.muli %c2_i32, %c8_i32_26 : i32
    %60 = tpu.assume_multiple %59, 8 : i32
    %61 = arith.index_cast %60 : i32 to index
    %c0_27 = arith.constant 0 : index
    %62 = vector.load %arg7[%61, %c0_27] : memref<32x128xf32, #tpu.memory_space<vmem>>, vector<8x128xf32>
    %cst_28 = arith.constant dense<0.000000e+00> : vector<8x128xf32>
    %63 = tpu.matmul %58, %10, %cst_28 {dimension_numbers = #tpu.dot_dimension_numbers<[1], [0], [0], [1], [0, 0, 1, 1], [], []>} : vector<8x32xf32>, vector<32x128xf32>, vector<8x128xf32> -> vector<8x128xf32>
    %64 = arith.addf %62, %63 : vector<8x128xf32>
    %cst_29 = arith.constant 5.000000e-01 : f32
    %65 = vector.broadcast %cst_29 : f32 to vector<8x128xf32>
    %66 = arith.mulf %65, %64 : vector<8x128xf32>
    %67 = math.tanh %66 : vector<8x128xf32>
    %cst_30 = arith.constant 5.000000e-01 : f32
    %68 = vector.broadcast %cst_30 : f32 to vector<8x128xf32>
    %69 = arith.mulf %68, %67 : vector<8x128xf32>
    %cst_31 = arith.constant 5.000000e-01 : f32
    %70 = vector.broadcast %cst_31 : f32 to vector<8x128xf32>
    %71 = arith.addf %69, %70 : vector<8x128xf32>
    %72 = vector.extract_strided_slice %71 {offsets = [0, 0], sizes = [8, 32], strides = [1, 1]} : vector<8x128xf32> to vector<8x32xf32>
    %73 = vector.extract_strided_slice %71 {offsets = [0, 32], sizes = [8, 32], strides = [1, 1]} : vector<8x128xf32> to vector<8x32xf32>
    %74 = vector.extract_strided_slice %71 {offsets = [0, 96], sizes = [8, 32], strides = [1, 1]} : vector<8x128xf32> to vector<8x32xf32>
    %75 = vector.extract_strided_slice %64 {offsets = [0, 64], sizes = [8, 32], strides = [1, 1]} : vector<8x128xf32> to vector<8x32xf32>
    %76 = math.tanh %75 : vector<8x32xf32>
    %77 = arith.mulf %73, %56 : vector<8x32xf32>
    %78 = arith.mulf %72, %76 : vector<8x32xf32>
    %79 = arith.addf %77, %78 : vector<8x32xf32>
    %80 = math.tanh %79 : vector<8x32xf32>
    %81 = arith.mulf %74, %80 : vector<8x32xf32>
    %c3_i32 = arith.constant 3 : i32
    %c8_i32_32 = arith.constant 8 : i32
    %82 = arith.muli %c3_i32, %c8_i32_32 : i32
    %83 = tpu.assume_multiple %82, 8 : i32
    %84 = arith.index_cast %83 : i32 to index
    %c0_33 = arith.constant 0 : index
    %85 = vector.load %arg7[%84, %c0_33] : memref<32x128xf32, #tpu.memory_space<vmem>>, vector<8x128xf32>
    %cst_34 = arith.constant dense<0.000000e+00> : vector<8x128xf32>
    %86 = tpu.matmul %81, %10, %cst_34 {dimension_numbers = #tpu.dot_dimension_numbers<[1], [0], [0], [1], [0, 0, 1, 1], [], []>} : vector<8x32xf32>, vector<32x128xf32>, vector<8x128xf32> -> vector<8x128xf32>
    %87 = arith.addf %85, %86 : vector<8x128xf32>
    %cst_35 = arith.constant 5.000000e-01 : f32
    %88 = vector.broadcast %cst_35 : f32 to vector<8x128xf32>
    %89 = arith.mulf %88, %87 : vector<8x128xf32>
    %90 = math.tanh %89 : vector<8x128xf32>
    %cst_36 = arith.constant 5.000000e-01 : f32
    %91 = vector.broadcast %cst_36 : f32 to vector<8x128xf32>
    %92 = arith.mulf %91, %90 : vector<8x128xf32>
    %cst_37 = arith.constant 5.000000e-01 : f32
    %93 = vector.broadcast %cst_37 : f32 to vector<8x128xf32>
    %94 = arith.addf %92, %93 : vector<8x128xf32>
    %95 = vector.extract_strided_slice %94 {offsets = [0, 0], sizes = [8, 32], strides = [1, 1]} : vector<8x128xf32> to vector<8x32xf32>
    %96 = vector.extract_strided_slice %94 {offsets = [0, 32], sizes = [8, 32], strides = [1, 1]} : vector<8x128xf32> to vector<8x32xf32>
    %97 = vector.extract_strided_slice %94 {offsets = [0, 96], sizes = [8, 32], strides = [1, 1]} : vector<8x128xf32> to vector<8x32xf32>
    %98 = vector.extract_strided_slice %87 {offsets = [0, 64], sizes = [8, 32], strides = [1, 1]} : vector<8x128xf32> to vector<8x32xf32>
    %99 = math.tanh %98 : vector<8x32xf32>
    %100 = arith.mulf %96, %79 : vector<8x32xf32>
    %101 = arith.mulf %95, %99 : vector<8x32xf32>
    %102 = arith.addf %100, %101 : vector<8x32xf32>
    %103 = math.tanh %102 : vector<8x32xf32>
    %104 = arith.mulf %97, %103 : vector<8x32xf32>
    %c4_i32 = arith.constant 4 : i32
    %c0_38 = arith.constant 0 : index
    %c0_39 = arith.constant 0 : index
    %105 = vector.load %arg5[%c0_38, %c0_39] : memref<8x32xf32, #tpu.memory_space<vmem>>, vector<8x32xf32>
    tpu.vector_store %arg5[%c0_38, %c0_39], %104 {strides = array<i32>} : memref<8x32xf32, #tpu.memory_space<vmem>>, vector<8x32xf32>,
    %c0_40 = arith.constant 0 : index
    %c0_41 = arith.constant 0 : index
    %106 = vector.load %arg6[%c0_40, %c0_41] : memref<8x32xf32, #tpu.memory_space<vmem>>, vector<8x32xf32>
    tpu.vector_store %arg6[%c0_40, %c0_41], %102 {strides = array<i32>} : memref<8x32xf32, #tpu.memory_space<vmem>>, vector<8x32xf32>,
    return
  }
  func.func @transform_0(%arg0: i32) -> (i32, i32) {
    %c0_i32 = arith.constant 0 : i32
    %c0_i32_0 = arith.constant 0 : i32
    return %arg0, %c0_i32 : i32, i32
  }
  func.func @transform_1(%arg0: i32) -> (i32, i32) {
    %c0_i32 = arith.constant 0 : i32
    %c0_i32_0 = arith.constant 0 : i32
    %c0_i32_1 = arith.constant 0 : i32
    return %c0_i32, %c0_i32_0 : i32, i32
  }
  func.func @transform_2(%arg0: i32) -> (i32, i32) {
    %c0_i32 = arith.constant 0 : i32
    %c0_i32_0 = arith.constant 0 : i32
    %c0_i32_1 = arith.constant 0 : i32
    return %c0_i32, %c0_i32_0 : i32, i32
  }
  func.func @transform_3(%arg0: i32) -> (i32, i32) {
    %c0_i32 = arith.constant 0 : i32
    %c0_i32_0 = arith.constant 0 : i32
    %c0_i32_1 = arith.constant 0 : i32
    return %c0_i32, %c0_i32_0 : i32, i32
  }
  func.func @transform_4(%arg0: i32) -> (i32, i32) {
    %c0_i32 = arith.constant 0 : i32
    %c0_i32_0 = arith.constant 0 : i32
    %c0_i32_1 = arith.constant 0 : i32
    return %c0_i32, %c0_i32_0 : i32, i32
  }
  func.func @transform_5(%arg0: i32) -> (i32, i32) {
    %c0_i32 = arith.constant 0 : i32
    %c0_i32_0 = arith.constant 0 : i32
    %c0_i32_1 = arith.constant 0 : i32
    return %c0_i32, %c0_i32_0 : i32, i32
  }
}

</mosaic_0001>

<llo_original>
// kernel: tpu_custom_call.1
$region0: #{tpu_custom_call.1}
  #allocation0 [shape = 'u32[]', space=smem, size = 0x4, offset = 0x4, fixed_abs, tag = 'smem constant byte address 0x4 - core index']
  #allocation1 [shape = 'u32[144,128]{1,0:T(1,128)}', space=vmem, size = 0x12000, scoped, tag = 'internal scratch']
  #allocation2 [shape = 'f32[32,128]{1,0:T(8,128)}', space=vmem, size = 0x4000, scoped, tag = 'scratch operand']
  %s0 = inlined_call_operand.vmem [shape: f32[64,32], index: 0, kind: input, shape index: {}]
  %s1 = inlined_call_operand.vmem [shape: f32[32,128], index: 1, kind: input, shape index: {}]
  %s2 = inlined_call_operand.vmem [shape: f32[32,128], index: 2, kind: input, shape index: {}]
  %s3 = inlined_call_operand.vmem [shape: f32[1,128], index: 3, kind: input, shape index: {}]
  %s4 = inlined_call_operand.hbm [shape: f32[8,32], index: 4, kind: output, shape index: {0}]
  %s5 = inlined_call_operand.hbm [shape: f32[8,32], index: 5, kind: output, shape index: {1}]
  %6 = xla_tuple %s4, %s5
  %s7 = sld [smem:[#allocation0]]
  $region61: #{tpu_custom_call.1} parent=0
    _
  %s9 = ssub.s32 1, %s7
  %s10 = scalar_select 0, %s9, %s7
  $region1: #{tpu_custom_call.1} parent=0
    #allocation3 [shape = 'u8[4096]{0}', space=vmem, size = 0x1000, scoped, tag = 'output window, operand 0, single buffered']
    #allocation4 [shape = 's32[2]{0}', space=sflag, size = 0x8, scoped, tag = 'scoped memory for tpu_custom_call.1']
    #allocation5 [shape = 'u8[4096]{0}', space=vmem, size = 0x1000, scoped, tag = 'output window, operand 1, single buffered']
    #allocation6 [shape = 's32[1]{0}', space=sflag, size = 0x4, scoped, tag = 'scoped memory for tpu_custom_call.1']
    %11 = vsyncpa [#allocation4], 0
    %12 = vsyncpa [#allocation6], 0
    loop: start=0, step=1, limit=4
    $region2: #{tpu_custom_call.1} parent=1 // loop_pre_header
      _
    $region3: #{tpu_custom_call.1} parent=1 // loop_header
      %s14 = sphi 0, %s18
      %p15 = scmp.ge.s32.totalorder %s14, 4
      %s24 = sphi 0, %s26
      %s27 = sphi 0, %s24
      %s28 = sphi 0, %s27
      %s44 = sphi 0, %s28
      %s48 = sphi 0, %s48
      %s50 = sphi 0, %s48
      %s51 = sphi 0, %s50
      %s65 = sphi 0, %s51
      %s69 = sphi 0, %s69
      %s71 = sphi 0, %s69
      %s72 = sphi 0, %s71
      %s86 = sphi 0, %s72
      %s90 = sphi 0, %s90
      %s92 = sphi 0, %s90
      %s93 = sphi 0, %s92
      %s107 = sphi 0, %s93
      %s111 = sphi 0, %s111
      %s113 = sphi 0, %s111
      %s114 = sphi 0, %s113
      %s128 = sphi 0, %s114
      %s132 = sphi 0, %s132
      %s134 = sphi 0, %s132
      %s135 = sphi 0, %s134
      %s149 = sphi 0, %s135
    $region4: #{tpu_custom_call.1} parent=1 // loop_header_branch
      %17 = sbr.rel (%p15) target = $region8
    $region5: #{tpu_custom_call.1} parent=1 // loop_body
      %s19 = ssub.s32 %s14, 1
      %s20 = ssub.s32 %s14, 2
      %s21 = sadd.s32 %s14, 1
      %s22 = ssub.s32 %s14, %s21
      %p23 = scmp.eq.s32.totalorder %s22, 0
      %s25 = sadd.s32 %s24, 1
      %s26 = scalar_select %p23, %s24, %s25
      %p29 = pneg %p23
      %p30 = scmp.eq.s32.totalorder %s14, 1
      %p31 = por %p29, %p30
      %p32 = scmp.ne.s32.totalorder %s24, %s27
      %p33 = scmp.eq.s32.totalorder %s14, 0
      %p34 = por %p32, %p33
      %p35 = scmp.ne.s32.totalorder %s24, %s27
      %p36 = scmp.eq.s32.totalorder %s19, 1
      %p37 = por %p35, %p36
      %p38 = scmp.ne.s32.totalorder %s27, %s28
      %p39 = scmp.eq.s32.totalorder %s19, 0
      %p40 = por %p38, %p39
      %p41 = scmp.ne.s32.totalorder %s27, %s28
      %p42 = scmp.eq.s32.totalorder %s20, 1
      %p43 = por %p41, %p42
      %p45 = scmp.ne.s32.totalorder %s28, %s44
      %p46 = scmp.eq.s32.totalorder %s20, 0
      %p47 = por %p45, %p46
      %s49 = sadd.s32 %s48, 1
      %p52 = scmp.eq.s32.totalorder %s14, 1
      %p53 = scmp.ne.s32.totalorder %s48, %s50
      %p54 = scmp.eq.s32.totalorder %s14, 0
      %p55 = por %p53, %p54
      %p56 = scmp.ne.s32.totalorder %s48, %s50
      %p57 = scmp.eq.s32.totalorder %s19, 1
      %p58 = por %p56, %p57
      %p59 = scmp.ne.s32.totalorder %s50, %s51
      %p60 = scmp.eq.s32.totalorder %s19, 0
      %p61 = por %p59, %p60
      %p62 = scmp.ne.s32.totalorder %s50, %s51
      %p63 = scmp.eq.s32.totalorder %s20, 1
      %p64 = por %p62, %p63
      %p66 = scmp.ne.s32.totalorder %s51, %s65
      %p67 = scmp.eq.s32.totalorder %s20, 0
      %p68 = por %p66, %p67
      %s70 = sadd.s32 %s69, 1
      %p73 = scmp.eq.s32.totalorder %s14, 1
      %p74 = scmp.ne.s32.totalorder %s69, %s71
      %p75 = scmp.eq.s32.totalorder %s14, 0
      %p76 = por %p74, %p75
      %p77 = scmp.ne.s32.totalorder %s69, %s71
      %p78 = scmp.eq.s32.totalorder %s19, 1
      %p79 = por %p77, %p78
      %p80 = scmp.ne.s32.totalorder %s71, %s72
      %p81 = scmp.eq.s32.totalorder %s19, 0
      %p82 = por %p80, %p81
      %p83 = scmp.ne.s32.totalorder %s71, %s72
      %p84 = scmp.eq.s32.totalorder %s20, 1
      %p85 = por %p83, %p84
      %p87 = scmp.ne.s32.totalorder %s72, %s86
      %p88 = scmp.eq.s32.totalorder %s20, 0
      %p89 = por %p87, %p88
      %s91 = sadd.s32 %s90, 1
      %p94 = scmp.eq.s32.totalorder %s14, 1
      %p95 = scmp.ne.s32.totalorder %s90, %s92
      %p96 = scmp.eq.s32.totalorder %s14, 0
      %p97 = por %p95, %p96
      %p98 = scmp.ne.s32.totalorder %s90, %s92
      %p99 = scmp.eq.s32.totalorder %s19, 1
      %p100 = por %p98, %p99
      %p101 = scmp.ne.s32.totalorder %s92, %s93
      %p102 = scmp.eq.s32.totalorder %s19, 0
      %p103 = por %p101, %p102
      %p104 = scmp.ne.s32.totalorder %s92, %s93
      %p105 = scmp.eq.s32.totalorder %s20, 1
      %p106 = por %p104, %p105
      %p108 = scmp.ne.s32.totalorder %s93, %s107
      %p109 = scmp.eq.s32.totalorder %s20, 0
      %p110 = por %p108, %p109
      %s112 = sadd.s32 %s111, 1
      %p115 = scmp.eq.s32.totalorder %s14, 1
      %p116 = scmp.ne.s32.totalorder %s111, %s113
      %p117 = scmp.eq.s32.totalorder %s14, 0
      %p118 = por %p116, %p117
      %p119 = scmp.ne.s32.totalorder %s111, %s113
      %p120 = scmp.eq.s32.totalorder %s19, 1
      %p121 = por %p119, %p120
      %p122 = scmp.ne.s32.totalorder %s113, %s114
      %p123 = scmp.eq.s32.totalorder %s19, 0
      %p124 = por %p122, %p123
      %p125 = scmp.ne.s32.totalorder %s113, %s114
      %p126 = scmp.eq.s32.totalorder %s20, 1
      %p127 = por %p125, %p126
      %p129 = scmp.ne.s32.totalorder %s114, %s128
      %p130 = scmp.eq.s32.totalorder %s20, 0
      %p131 = por %p129, %p130
      %s133 = sadd.s32 %s132, 1
      %p136 = scmp.eq.s32.totalorder %s14, 1
      %p137 = scmp.ne.s32.totalorder %s132, %s134
      %p138 = scmp.eq.s32.totalorder %s14, 0
      %p139 = por %p137, %p138
      %p140 = scmp.ne.s32.totalorder %s132, %s134
      %p141 = scmp.eq.s32.totalorder %s19, 1
      %p142 = por %p140, %p141
      %p143 = scmp.ne.s32.totalorder %s134, %s135
      %p144 = scmp.eq.s32.totalorder %s19, 0
      %p145 = por %p143, %p144
      %p146 = scmp.ne.s32.totalorder %s134, %s135
      %p147 = scmp.eq.s32.totalorder %s20, 1
      %p148 = por %p146, %p147
      %p150 = scmp.ne.s32.totalorder %s135, %s149
      %p151 = scmp.eq.s32.totalorder %s20, 0
      %p152 = por %p150, %p151
      %p153 = scmp.le.s32.totalorder 1, %s14
      %p154 = scmp.lt.s32.totalorder %s14, 3
      %p155 = pnand %p153, %p154
      %p156 = pneg %p155
      // Predicated region
      $region9: #{tpu_custom_call.1} parent=5 // pred_check
        _
      $region10: #{tpu_custom_call.1} parent=5 // pred_check_branch
        %158 = sbr.rel (%p155) target = $region12
      $region11: #{tpu_custom_call.1} parent=5 // pred_region
        %s159 = ssub.s32 %s14, 1
        // Predicated region
        $region13: #{tpu_custom_call.1} parent=11 // pred_check
          %p160 = pneg %p61
        $region14: #{tpu_custom_call.1} parent=11 // pred_check_branch
          %162 = sbr.rel (%p160) target = $region16
        $region15: #{tpu_custom_call.1} parent=11 // pred_region
          _
        $region16: #{tpu_custom_call.1} parent=11 // pred_fallthru
          _
        // Predicated region
        $region17: #{tpu_custom_call.1} parent=11 // pred_check
          %p163 = pneg %p82
        $region18: #{tpu_custom_call.1} parent=11 // pred_check_branch
          %165 = sbr.rel (%p163) target = $region20
        $region19: #{tpu_custom_call.1} parent=11 // pred_region
          _
        $region20: #{tpu_custom_call.1} parent=11 // pred_fallthru
          _
        // Predicated region
        $region21: #{tpu_custom_call.1} parent=11 // pred_check
          %p166 = pneg %p103
        $region22: #{tpu_custom_call.1} parent=11 // pred_check_branch
          %168 = sbr.rel (%p166) target = $region24
        $region23: #{tpu_custom_call.1} parent=11 // pred_region
          _
        $region24: #{tpu_custom_call.1} parent=11 // pred_fallthru
          _
      $region12: #{tpu_custom_call.1} parent=5 // pred_fallthru
        _
      %p169 = scmp.lt.s32.totalorder %s14, 2
      // Predicated region
      $region25: #{tpu_custom_call.1} parent=5 // pred_check
        %p170 = pneg %p169
      $region26: #{tpu_custom_call.1} parent=5 // pred_check_branch
        %172 = sbr.rel (%p170) target = $region28
      $region27: #{tpu_custom_call.1} parent=5 // pred_region
        // Predicated region
        $region29: #{tpu_custom_call.1} parent=27 // pred_check
          %p173 = pneg %p34
        $region30: #{tpu_custom_call.1} parent=27 // pred_check_branch
          %175 = sbr.rel (%p173) target = $region32
        $region31: #{tpu_custom_call.1} parent=27 // pred_region
          %s176 = smul.u32 4, %s14
          %p177 = scmp.lt.s32.totalorder %s176, 7
          %s178 = scalar_select %p177, %s176, 7
          %s179 = smul.addr %s178, 8
          %s180 = scalar_lea.vmem %s0, %s179
          %s181 = smul.u32 4, %s14
        $region32: #{tpu_custom_call.1} parent=27 // pred_fallthru
          _
      $region28: #{tpu_custom_call.1} parent=5 // pred_fallthru
        _
      %p182 = scmp.le.s32.totalorder 1, %s14
      %p183 = scmp.lt.s32.totalorder %s14, 3
      %p184 = pnand %p182, %p183
      %p185 = pneg %p184
      // Predicated region
      $region33: #{tpu_custom_call.1} parent=5 // pred_check
        _
      $region34: #{tpu_custom_call.1} parent=5 // pred_check_branch
        %187 = sbr.rel (%p184) target = $region36
      $region35: #{tpu_custom_call.1} parent=5 // pred_region
        %s188 = ssub.s32 %s14, 1
        %s189 = smul.u32 4, %s19
        %p190 = scmp.lt.s32.totalorder %s189, 7
        %s191 = scalar_select %p190, %s189, 7
        %s192 = smul.addr %s191, 8
        %s193 = scalar_lea.vmem %s0, %s192
        %p194 = pneg %p40
        %p195 = pneg %p37
        %p196 = pneg %p61
        %p197 = pneg %p58
        %p198 = pneg %p82
        %p199 = pneg %p79
        %p200 = pneg %p103
        %p201 = pneg %p100
        %p202 = pneg %p124
        %p203 = pneg %p121
        %p204 = pneg %p145
        %p205 = pneg %p142
        %s206 = smul.u32 4, %s19
        %p207 = scmp.lt.s32.totalorder %s206, 7
        %s208 = scalar_select %p207, %s206, 7
        %s209 = smul.addr %s208, 8
        %s210 = scalar_lea.vmem %s0, %s209
        %s211 = smul.u32 4, %s19
        %p212 = scmp.eq.s32.totalorder %s19, 0
        // Predicated region
        $region37: #{tpu_custom_call.1} parent=35 // pred_check
          %p213 = pneg %p212
        $region38: #{tpu_custom_call.1} parent=35 // pred_check_branch
          %215 = sbr.rel (%p213) target = $region40
        $region39: #{tpu_custom_call.1} parent=35 // pred_region
          %vm216 = vcmask 261120
          %217 = vst.msk [vmem:[#allocation3] sm:$0xff] %vm216, 0.0
          %218 = vst.msk [vmem:[#allocation5] sm:$0xff] %vm216, 0.0
        $region40: #{tpu_custom_call.1} parent=35 // pred_fallthru
          _
        %v219 = vld [vmem:[%s210] sm:$0xff]
        %v220 = vld [vmem:[%s210 + $0x8] sm:$0xff]
        %v221 = vld [vmem:[%s210 + $0x10] sm:$0xff]
        %v222 = vld [vmem:[%s210 + $0x18] sm:$0xff]
        %v223 = vld [vmem:[%s1] sm:$0xff]
        %v224 = vld [vmem:[%s1 + $0x8] sm:$0xff]
        %v225 = vld [vmem:[%s1 + $0x10] sm:$0xff]
        %v226 = vld [vmem:[%s1 + $0x18] sm:$0xff]
        %v227 = vld [vmem:[%s3] sm:$0x1]
        %v229 = vlaneseq
        %v230 = vshrl.u32 %v229, 7
        %v231 = vsub.s32 0, %v230
        %v232 = vrot.slane %v227, %v231
        %vm234 = vcmask 261120
        %v236 = vsel %vm234, %v219, 0
        %v239 = vsel %vm234, %v220, 0
        %v242 = vsel %vm234, %v221, 0
        %v245 = vsel %vm234, %v222, 0
        %247 = vmatprep.subr.mxu0 0.0
        %248 = vmatpush1.msra.mxu0 0.0
        %249 = vmatprep.subr.mxu0 0.0
        %250 = vmatpush1.msra.mxu0 0.0
        %251 = vmatprep.subr.mxu0 0.0
        %252 = vmatpush1.msra.mxu0 0.0
        %253 = vmatprep.subr.mxu0 0.0
        %254 = vmatpush1.msra.mxu0 0.0
        %255 = vmatprep.subr.mxu0 0.0
        %256 = vmatpush1.msra.mxu0 0.0
        %257 = vmatprep.subr.mxu0 0.0
        %258 = vmatpush1.msra.mxu0 0.0
        %259 = vmatprep.subr.mxu0 0.0
        %260 = vmatpush1.msra.mxu0 0.0
        %261 = vmatprep.subr.mxu0 0.0
        %262 = vmatpush1.msra.mxu0 0.0
        %263 = vmatprep.subr.mxu0 0.0
        %264 = vmatpush1.msra.mxu0 0.0
        %265 = vmatprep.subr.mxu0 0.0
        %266 = vmatpush1.msra.mxu0 0.0
        %267 = vmatprep.subr.mxu0 0.0
        %268 = vmatpush1.msra.mxu0 0.0
        %269 = vmatprep.subr.mxu0 0.0
        %270 = vmatpush1.msra.mxu0 0.0
        %271 = vmatprep.subr.mxu0 0.0
        %272 = vmatpush1.msra.mxu0 %v226
        %273 = vmatprep.subr.mxu0 0.0
        %274 = vmatpush1.msra.mxu0 %v225
        %275 = vmatprep.subr.mxu0 0.0
        %276 = vmatpush1.msra.mxu0 %v224
        %277 = vmatprep.subr.mxu0 0.0
        %278 = vmatpush1.msra.mxu0 %v223
        %279 = vmatprep.subr.mxu0 0.0
        %280 = vmatpush2.msra.mxu0 0.0
        %281 = vmatprep.subr.mxu0 0.0
        %282 = vmatpush2.msra.mxu0 0.0
        %283 = vmatprep.subr.mxu0 0.0
        %284 = vmatpush2.msra.mxu0 0.0
        %285 = vmatprep.subr.mxu0 0.0
        %286 = vmatpush2.msra.mxu0 0.0
        %287 = vmatprep.subr.mxu0 0.0
        %288 = vmatpush2.msra.mxu0 0.0
        %289 = vmatprep.subr.mxu0 0.0
        %290 = vmatpush2.msra.mxu0 0.0
        %291 = vmatprep.subr.mxu0 0.0
        %292 = vmatpush2.msra.mxu0 0.0
        %293 = vmatprep.subr.mxu0 0.0
        %294 = vmatpush2.msra.mxu0 0.0
        %295 = vmatprep.subr.mxu0 0.0
        %296 = vmatpush2.msra.mxu0 0.0
        %297 = vmatprep.subr.mxu0 0.0
        %298 = vmatpush2.msra.mxu0 0.0
        %299 = vmatprep.subr.mxu0 0.0
        %300 = vmatpush2.msra.mxu0 0.0
        %301 = vmatprep.subr.mxu0 0.0
        %302 = vmatpush2.msra.mxu0 0.0
        %303 = vmatprep.subr.mxu0 0.0
        %304 = vmatpush2.msra.mxu0 0.0
        %305 = vmatprep.subr.mxu0 0.0
        %306 = vmatpush2.msra.mxu0 0.0
        %307 = vmatprep.subr.mxu0 0.0
        %308 = vmatpush2.msra.mxu0 0.0
        %309 = vmatprep.subr.mxu0 0.0
        %310 = vmatpush2.msra.mxu0 0.0
        %311 = vmatprep.mubr.f32.mxu0 0.0
        %312 = vmatmul.mubr.f32.gmra.mxu0 %v236
        %v313 = vpop.f32.mrf.mxu0
        %v314 = vadd.f32 %v232, %v313
        %v315 = vpop.f32.mrf.mxu0
        %316 = vmatprep.mubr.f32.mxu0 0.0
        %317 = vmatmul.mubr.f32.gmra.mxu0 %v239
        %v318 = vpop.f32.mrf.mxu0
        %v319 = vadd.f32 %v232, %v318
        %v320 = vpop.f32.mrf.mxu0
        %321 = vmatprep.mubr.f32.mxu0 0.0
        %322 = vmatmul.mubr.f32.gmra.mxu0 %v242
        %v323 = vpop.f32.mrf.mxu0
        %v324 = vadd.f32 %v232, %v323
        %v325 = vpop.f32.mrf.mxu0
        %326 = vmatprep.mubr.f32.mxu0 0.0
        %327 = vmatmul.mubr.f32.gmra.mxu0 %v245
        %v328 = vpop.f32.mrf.mxu0
        %v329 = vadd.f32 %v232, %v328
        %v330 = vpop.f32.mrf.mxu0
        %331 = vdwg.mxu0
        %332 = vst [vmem:[#allocation2] sm:$0xff] %v314
        %333 = vst [vmem:[#allocation2 + $0x8] sm:$0xff] %v319
        %334 = vst [vmem:[#allocation2 + $0x10] sm:$0xff] %v324
        %335 = vst [vmem:[#allocation2 + $0x18] sm:$0xff] %v329
        %v336 = vld [vmem:[%s2] sm:$0xff]
        %v337 = vld [vmem:[%s2 + $0x8] sm:$0xff]
        %v338 = vld [vmem:[%s2 + $0x10] sm:$0xff]
        %v339 = vld [vmem:[%s2 + $0x18] sm:$0xff]
        %v340 = vld [vmem:[#allocation3] sm:$0xff]
        %v341 = vld [vmem:[#allocation5] sm:$0xff]
        %v342 = vld [vmem:[#allocation2] sm:$0xff]
        %v344 = vsel %vm234, %v340, 0
        %346 = vmatprep.subr.mxu0 0.0
        %347 = vmatpush1.msra.mxu0 0.0
        %348 = vmatprep.subr.mxu0 0.0
        %349 = vmatpush1.msra.mxu0 0.0
        %350 = vmatprep.subr.mxu0 0.0
        %351 = vmatpush1.msra.mxu0 0.0
        %352 = vmatprep.subr.mxu0 0.0
        %353 = vmatpush1.msra.mxu0 0.0
        %354 = vmatprep.subr.mxu0 0.0
        %355 = vmatpush1.msra.mxu0 0.0
        %356 = vmatprep.subr.mxu0 0.0
        %357 = vmatpush1.msra.mxu0 0.0
        %358 = vmatprep.subr.mxu0 0.0
        %359 = vmatpush1.msra.mxu0 0.0
        %360 = vmatprep.subr.mxu0 0.0
        %361 = vmatpush1.msra.mxu0 0.0
        %362 = vmatprep.subr.mxu0 0.0
        %363 = vmatpush1.msra.mxu0 0.0
        %364 = vmatprep.subr.mxu0 0.0
        %365 = vmatpush1.msra.mxu0 0.0
        %366 = vmatprep.subr.mxu0 0.0
        %367 = vmatpush1.msra.mxu0 0.0
        %368 = vmatprep.subr.mxu0 0.0
        %369 = vmatpush1.msra.mxu0 0.0
        %370 = vmatprep.subr.mxu0 0.0
        %371 = vmatpush1.msra.mxu0 %v339
        %372 = vmatprep.subr.mxu0 0.0
        %373 = vmatpush1.msra.mxu0 %v338
        %374 = vmatprep.subr.mxu0 0.0
        %375 = vmatpush1.msra.mxu0 %v337
        %376 = vmatprep.subr.mxu0 0.0
        %377 = vmatpush1.msra.mxu0 %v336
        %378 = vmatprep.subr.mxu0 0.0
        %379 = vmatpush2.msra.mxu0 0.0
        %380 = vmatprep.subr.mxu0 0.0
        %381 = vmatpush2.msra.mxu0 0.0
        %382 = vmatprep.subr.mxu0 0.0
        %383 = vmatpush2.msra.mxu0 0.0
        %384 = vmatprep.subr.mxu0 0.0
        %385 = vmatpush2.msra.mxu0 0.0
        %386 = vmatprep.subr.mxu0 0.0
        %387 = vmatpush2.msra.mxu0 0.0
        %388 = vmatprep.subr.mxu0 0.0
        %389 = vmatpush2.msra.mxu0 0.0
        %390 = vmatprep.subr.mxu0 0.0
        %391 = vmatpush2.msra.mxu0 0.0
        %392 = vmatprep.subr.mxu0 0.0
        %393 = vmatpush2.msra.mxu0 0.0
        %394 = vmatprep.subr.mxu0 0.0
        %395 = vmatpush2.msra.mxu0 0.0
        %396 = vmatprep.subr.mxu0 0.0
        %397 = vmatpush2.msra.mxu0 0.0
        %398 = vmatprep.subr.mxu0 0.0
        %399 = vmatpush2.msra.mxu0 0.0
        %400 = vmatprep.subr.mxu0 0.0
        %401 = vmatpush2.msra.mxu0 0.0
        %402 = vmatprep.subr.mxu0 0.0
        %403 = vmatpush2.msra.mxu0 0.0
        %404 = vmatprep.subr.mxu0 0.0
        %405 = vmatpush2.msra.mxu0 0.0
        %406 = vmatprep.subr.mxu0 0.0
        %407 = vmatpush2.msra.mxu0 0.0
        %408 = vmatprep.subr.mxu0 0.0
        %409 = vmatpush2.msra.mxu0 0.0
        %410 = vmatprep.mubr.f32.mxu0 0.0
        %411 = vmatmul.mubr.f32.gmra.mxu0 %v344
        %v412 = vpop.f32.mrf.mxu0
        %v413 = vadd.f32 0.0, %v412
        %v414 = vpop.f32.mrf.mxu0
        %415 = vdwg.mxu0
        %v416 = vadd.f32 %v342, %v413
        %v417 = vmul.f32 %v416, 0.5
        %v418 = vtanh.pop %v417
        %v419 = vmul.f32 %v418, 0.5
        %v420 = vadd.f32 %v419, 0.5
        %v421 = vtanh.pop %v416
        %423 = vrot.lane.b32.xlu0 %v341, 32
        %v424 = vpop.permute.xlu0 %423
        %v426 = vmul.f32 %v420, %v424
        %428 = vrot.lane.b32.xlu0 %v421, 64
        %v429 = vpop.permute.xlu0 %428
        %v431 = vmul.f32 %v420, %v429
        %433 = vrot.lane.b32.xlu0 %v431, 32
        %v434 = vpop.permute.xlu0 %433
        %v436 = vadd.f32 %v426, %v434
        %v437 = vtanh.pop %v436
        %439 = vrot.lane.b32.xlu0 %v437, 64
        %v440 = vpop.permute.xlu0 %439
        %v442 = vmul.f32 %v420, %v440
        %s443 = scalar_lea.vmem [#allocation2], 8
        %v444 = vld [vmem:[%s443] sm:$0xff]
        %446 = vrot.lane.b32.xlu0 %v442, 32
        %v447 = vpop.permute.xlu0 %446
        %v448 = vsel %vm234, %v447, 0
        %450 = vmatprep.subr.mxu0 0.0
        %451 = vmatpush1.msra.mxu0 0.0
        %452 = vmatprep.subr.mxu0 0.0
        %453 = vmatpush1.msra.mxu0 0.0
        %454 = vmatprep.subr.mxu0 0.0
        %455 = vmatpush1.msra.mxu0 0.0
        %456 = vmatprep.subr.mxu0 0.0
        %457 = vmatpush1.msra.mxu0 0.0
        %458 = vmatprep.subr.mxu0 0.0
        %459 = vmatpush1.msra.mxu0 0.0
        %460 = vmatprep.subr.mxu0 0.0
        %461 = vmatpush1.msra.mxu0 0.0
        %462 = vmatprep.subr.mxu0 0.0
        %463 = vmatpush1.msra.mxu0 0.0
        %464 = vmatprep.subr.mxu0 0.0
        %465 = vmatpush1.msra.mxu0 0.0
        %466 = vmatprep.subr.mxu0 0.0
        %467 = vmatpush1.msra.mxu0 0.0
        %468 = vmatprep.subr.mxu0 0.0
        %469 = vmatpush1.msra.mxu0 0.0
        %470 = vmatprep.subr.mxu0 0.0
        %471 = vmatpush1.msra.mxu0 0.0
        %472 = vmatprep.subr.mxu0 0.0
        %473 = vmatpush1.msra.mxu0 0.0
        %474 = vmatprep.subr.mxu0 0.0
        %475 = vmatpush1.msra.mxu0 %v339
        %476 = vmatprep.subr.mxu0 0.0
        %477 = vmatpush1.msra.mxu0 %v338
        %478 = vmatprep.subr.mxu0 0.0
        %479 = vmatpush1.msra.mxu0 %v337
        %480 = vmatprep.subr.mxu0 0.0
        %481 = vmatpush1.msra.mxu0 %v336
        %482 = vmatprep.subr.mxu0 0.0
        %483 = vmatpush2.msra.mxu0 0.0
        %484 = vmatprep.subr.mxu0 0.0
        %485 = vmatpush2.msra.mxu0 0.0
        %486 = vmatprep.subr.mxu0 0.0
        %487 = vmatpush2.msra.mxu0 0.0
        %488 = vmatprep.subr.mxu0 0.0
        %489 = vmatpush2.msra.mxu0 0.0
        %490 = vmatprep.subr.mxu0 0.0
        %491 = vmatpush2.msra.mxu0 0.0
        %492 = vmatprep.subr.mxu0 0.0
        %493 = vmatpush2.msra.mxu0 0.0
        %494 = vmatprep.subr.mxu0 0.0
        %495 = vmatpush2.msra.mxu0 0.0
        %496 = vmatprep.subr.mxu0 0.0
        %497 = vmatpush2.msra.mxu0 0.0
        %498 = vmatprep.subr.mxu0 0.0
        %499 = vmatpush2.msra.mxu0 0.0
        %500 = vmatprep.subr.mxu0 0.0
        %501 = vmatpush2.msra.mxu0 0.0
        %502 = vmatprep.subr.mxu0 0.0
        %503 = vmatpush2.msra.mxu0 0.0
        %504 = vmatprep.subr.mxu0 0.0
        %505 = vmatpush2.msra.mxu0 0.0
        %506 = vmatprep.subr.mxu0 0.0
        %507 = vmatpush2.msra.mxu0 0.0
        %508 = vmatprep.subr.mxu0 0.0
        %509 = vmatpush2.msra.mxu0 0.0
        %510 = vmatprep.subr.mxu0 0.0
        %511 = vmatpush2.msra.mxu0 0.0
        %512 = vmatprep.subr.mxu0 0.0
        %513 = vmatpush2.msra.mxu0 0.0
        %514 = vmatprep.mubr.f32.mxu0 0.0
        %515 = vmatmul.mubr.f32.gmra.mxu0 %v448
        %v516 = vpop.f32.mrf.mxu0
        %v517 = vadd.f32 0.0, %v516
        %v518 = vpop.f32.mrf.mxu0
        %519 = vdwg.mxu0
        %v520 = vadd.f32 %v444, %v517
        %v521 = vmul.f32 %v520, 0.5
        %v522 = vtanh.pop %v521
        %v523 = vmul.f32 %v522, 0.5
        %v524 = vadd.f32 %v523, 0.5
        %v525 = vtanh.pop %v520
        %v526 = vmul.f32 %v524, %v436
        %528 = vrot.lane.b32.xlu0 %v525, 64
        %v529 = vpop.permute.xlu0 %528
        %v531 = vmul.f32 %v524, %v529
        %533 = vrot.lane.b32.xlu0 %v531, 32
        %v534 = vpop.permute.xlu0 %533
        %v536 = vadd.f32 %v526, %v534
        %v537 = vtanh.pop %v536
        %539 = vrot.lane.b32.xlu0 %v537, 64
        %v540 = vpop.permute.xlu0 %539
        %v542 = vmul.f32 %v524, %v540
        %s543 = scalar_lea.vmem [#allocation2], 16
        %v544 = vld [vmem:[%s543] sm:$0xff]
        %546 = vrot.lane.b32.xlu0 %v542, 32
        %v547 = vpop.permute.xlu0 %546
        %v548 = vsel %vm234, %v547, 0
        %550 = vmatprep.subr.mxu0 0.0
        %551 = vmatpush1.msra.mxu0 0.0
        %552 = vmatprep.subr.mxu0 0.0
        %553 = vmatpush1.msra.mxu0 0.0
        %554 = vmatprep.subr.mxu0 0.0
        %555 = vmatpush1.msra.mxu0 0.0
        %556 = vmatprep.subr.mxu0 0.0
        %557 = vmatpush1.msra.mxu0 0.0
        %558 = vmatprep.subr.mxu0 0.0
        %559 = vmatpush1.msra.mxu0 0.0
        %560 = vmatprep.subr.mxu0 0.0
        %561 = vmatpush1.msra.mxu0 0.0
        %562 = vmatprep.subr.mxu0 0.0
        %563 = vmatpush1.msra.mxu0 0.0
        %564 = vmatprep.subr.mxu0 0.0
        %565 = vmatpush1.msra.mxu0 0.0
        %566 = vmatprep.subr.mxu0 0.0
        %567 = vmatpush1.msra.mxu0 0.0
        %568 = vmatprep.subr.mxu0 0.0
        %569 = vmatpush1.msra.mxu0 0.0
        %570 = vmatprep.subr.mxu0 0.0
        %571 = vmatpush1.msra.mxu0 0.0
        %572 = vmatprep.subr.mxu0 0.0
        %573 = vmatpush1.msra.mxu0 0.0
        %574 = vmatprep.subr.mxu0 0.0
        %575 = vmatpush1.msra.mxu0 %v339
        %576 = vmatprep.subr.mxu0 0.0
        %577 = vmatpush1.msra.mxu0 %v338
        %578 = vmatprep.subr.mxu0 0.0
        %579 = vmatpush1.msra.mxu0 %v337
        %580 = vmatprep.subr.mxu0 0.0
        %581 = vmatpush1.msra.mxu0 %v336
        %582 = vmatprep.subr.mxu0 0.0
        %583 = vmatpush2.msra.mxu0 0.0
        %584 = vmatprep.subr.mxu0 0.0
        %585 = vmatpush2.msra.mxu0 0.0
        %586 = vmatprep.subr.mxu0 0.0
        %587 = vmatpush2.msra.mxu0 0.0
        %588 = vmatprep.subr.mxu0 0.0
        %589 = vmatpush2.msra.mxu0 0.0
        %590 = vmatprep.subr.mxu0 0.0
        %591 = vmatpush2.msra.mxu0 0.0
        %592 = vmatprep.subr.mxu0 0.0
        %593 = vmatpush2.msra.mxu0 0.0
        %594 = vmatprep.subr.mxu0 0.0
        %595 = vmatpush2.msra.mxu0 0.0
        %596 = vmatprep.subr.mxu0 0.0
        %597 = vmatpush2.msra.mxu0 0.0
        %598 = vmatprep.subr.mxu0 0.0
        %599 = vmatpush2.msra.mxu0 0.0
        %600 = vmatprep.subr.mxu0 0.0
        %601 = vmatpush2.msra.mxu0 0.0
        %602 = vmatprep.subr.mxu0 0.0
        %603 = vmatpush2.msra.mxu0 0.0
        %604 = vmatprep.subr.mxu0 0.0
        %605 = vmatpush2.msra.mxu0 0.0
        %606 = vmatprep.subr.mxu0 0.0
        %607 = vmatpush2.msra.mxu0 0.0
        %608 = vmatprep.subr.mxu0 0.0
        %609 = vmatpush2.msra.mxu0 0.0
        %610 = vmatprep.subr.mxu0 0.0
        %611 = vmatpush2.msra.mxu0 0.0
        %612 = vmatprep.subr.mxu0 0.0
        %613 = vmatpush2.msra.mxu0 0.0
        %614 = vmatprep.mubr.f32.mxu0 0.0
        %615 = vmatmul.mubr.f32.gmra.mxu0 %v548
        %v616 = vpop.f32.mrf.mxu0
        %v617 = vadd.f32 0.0, %v616
        %v618 = vpop.f32.mrf.mxu0
        %619 = vdwg.mxu0
        %v620 = vadd.f32 %v544, %v617
        %v621 = vmul.f32 %v620, 0.5
        %v622 = vtanh.pop %v621
        %v623 = vmul.f32 %v622, 0.5
        %v624 = vadd.f32 %v623, 0.5
        %v625 = vtanh.pop %v620
        %v626 = vmul.f32 %v624, %v536
        %628 = vrot.lane.b32.xlu0 %v625, 64
        %v629 = vpop.permute.xlu0 %628
        %v631 = vmul.f32 %v624, %v629
        %633 = vrot.lane.b32.xlu0 %v631, 32
        %v634 = vpop.permute.xlu0 %633
        %v636 = vadd.f32 %v626, %v634
        %v637 = vtanh.pop %v636
        %639 = vrot.lane.b32.xlu0 %v637, 64
        %v640 = vpop.permute.xlu0 %639
        %v642 = vmul.f32 %v624, %v640
        %s643 = scalar_lea.vmem [#allocation2], 24
        %v644 = vld [vmem:[%s643] sm:$0xff]
        %646 = vrot.lane.b32.xlu0 %v642, 32
        %v647 = vpop.permute.xlu0 %646
        %v648 = vsel %vm234, %v647, 0
        %650 = vmatprep.subr.mxu0 0.0
        %651 = vmatpush1.msra.mxu0 0.0
        %652 = vmatprep.subr.mxu0 0.0
        %653 = vmatpush1.msra.mxu0 0.0
        %654 = vmatprep.subr.mxu0 0.0
        %655 = vmatpush1.msra.mxu0 0.0
        %656 = vmatprep.subr.mxu0 0.0
        %657 = vmatpush1.msra.mxu0 0.0
        %658 = vmatprep.subr.mxu0 0.0
        %659 = vmatpush1.msra.mxu0 0.0
        %660 = vmatprep.subr.mxu0 0.0
        %661 = vmatpush1.msra.mxu0 0.0
        %662 = vmatprep.subr.mxu0 0.0
        %663 = vmatpush1.msra.mxu0 0.0
        %664 = vmatprep.subr.mxu0 0.0
        %665 = vmatpush1.msra.mxu0 0.0
        %666 = vmatprep.subr.mxu0 0.0
        %667 = vmatpush1.msra.mxu0 0.0
        %668 = vmatprep.subr.mxu0 0.0
        %669 = vmatpush1.msra.mxu0 0.0
        %670 = vmatprep.subr.mxu0 0.0
        %671 = vmatpush1.msra.mxu0 0.0
        %672 = vmatprep.subr.mxu0 0.0
        %673 = vmatpush1.msra.mxu0 0.0
        %674 = vmatprep.subr.mxu0 0.0
        %675 = vmatpush1.msra.mxu0 %v339
        %676 = vmatprep.subr.mxu0 0.0
        %677 = vmatpush1.msra.mxu0 %v338
        %678 = vmatprep.subr.mxu0 0.0
        %679 = vmatpush1.msra.mxu0 %v337
        %680 = vmatprep.subr.mxu0 0.0
        %681 = vmatpush1.msra.mxu0 %v336
        %682 = vmatprep.subr.mxu0 0.0
        %683 = vmatpush2.msra.mxu0 0.0
        %684 = vmatprep.subr.mxu0 0.0
        %685 = vmatpush2.msra.mxu0 0.0
        %686 = vmatprep.subr.mxu0 0.0
        %687 = vmatpush2.msra.mxu0 0.0
        %688 = vmatprep.subr.mxu0 0.0
        %689 = vmatpush2.msra.mxu0 0.0
        %690 = vmatprep.subr.mxu0 0.0
        %691 = vmatpush2.msra.mxu0 0.0
        %692 = vmatprep.subr.mxu0 0.0
        %693 = vmatpush2.msra.mxu0 0.0
        %694 = vmatprep.subr.mxu0 0.0
        %695 = vmatpush2.msra.mxu0 0.0
        %696 = vmatprep.subr.mxu0 0.0
        %697 = vmatpush2.msra.mxu0 0.0
        %698 = vmatprep.subr.mxu0 0.0
        %699 = vmatpush2.msra.mxu0 0.0
        %700 = vmatprep.subr.mxu0 0.0
        %701 = vmatpush2.msra.mxu0 0.0
        %702 = vmatprep.subr.mxu0 0.0
        %703 = vmatpush2.msra.mxu0 0.0
        %704 = vmatprep.subr.mxu0 0.0
        %705 = vmatpush2.msra.mxu0 0.0
        %706 = vmatprep.subr.mxu0 0.0
        %707 = vmatpush2.msra.mxu0 0.0
        %708 = vmatprep.subr.mxu0 0.0
        %709 = vmatpush2.msra.mxu0 0.0
        %710 = vmatprep.subr.mxu0 0.0
        %711 = vmatpush2.msra.mxu0 0.0
        %712 = vmatprep.subr.mxu0 0.0
        %713 = vmatpush2.msra.mxu0 0.0
        %714 = vmatprep.mubr.f32.mxu0 0.0
        %715 = vmatmul.mubr.f32.gmra.mxu0 %v648
        %v716 = vpop.f32.mrf.mxu0
        %v717 = vadd.f32 0.0, %v716
        %v718 = vpop.f32.mrf.mxu0
        %719 = vdwg.mxu0
        %v720 = vadd.f32 %v644, %v717
        %v721 = vmul.f32 %v720, 0.5
        %v722 = vtanh.pop %v721
        %v723 = vmul.f32 %v722, 0.5
        %v724 = vadd.f32 %v723, 0.5
        %v725 = vtanh.pop %v720
        %v726 = vmul.f32 %v724, %v636
        %728 = vrot.lane.b32.xlu0 %v725, 64
        %v729 = vpop.permute.xlu0 %728
        %v731 = vmul.f32 %v724, %v729
        %733 = vrot.lane.b32.xlu0 %v731, 32
        %v734 = vpop.permute.xlu0 %733
        %v736 = vadd.f32 %v726, %v734
        %v737 = vtanh.pop %v736
        %739 = vrot.lane.b32.xlu0 %v737, 64
        %v740 = vpop.permute.xlu0 %739
        %v742 = vmul.f32 %v724, %v740
        %744 = vrot.lane.b32.xlu0 %v742, 32
        %v745 = vpop.permute.xlu0 %744
        %747 = vst.msk [vmem:[#allocation3] sm:$0xff] %vm234, %v745
        %749 = vrot.lane.b32.xlu0 %v736, 96
        %v750 = vpop.permute.xlu0 %749
        %752 = vst.msk [vmem:[#allocation5] sm:$0xff] %vm234, %v750
        // Predicated region
        $region41: #{tpu_custom_call.1} parent=35 // pred_check
          %p753 = pneg %p121
        $region42: #{tpu_custom_call.1} parent=35 // pred_check_branch
          %755 = sbr.rel (%p753) target = $region44
        $region43: #{tpu_custom_call.1} parent=35 // pred_region
          %s757 = ssub.s32 128, 128
          %758 = vsyncadd [#allocation4], %s757
          %s760 = sshll.u32 [#allocation3], 4
          %s761 = int_to_ptr.vmem [resolvable:$true] %s760
          %763 = dma.vmem_to_hbm [thread:$0]  %s761, 128, %s4, [#allocation4]
        $region44: #{tpu_custom_call.1} parent=35 // pred_fallthru
          _
        // Predicated region
        $region45: #{tpu_custom_call.1} parent=35 // pred_check
          %p764 = pneg %p142
        $region46: #{tpu_custom_call.1} parent=35 // pred_check_branch
          %766 = sbr.rel (%p764) target = $region48
        $region47: #{tpu_custom_call.1} parent=35 // pred_region
          %s768 = ssub.s32 128, 128
          %769 = vsyncadd [#allocation6], %s768
          %s771 = sshll.u32 [#allocation5], 4
          %s772 = int_to_ptr.vmem [resolvable:$true] %s771
          %774 = dma.vmem_to_hbm [thread:$0]  %s772, 128, %s5, [#allocation6]
        $region48: #{tpu_custom_call.1} parent=35 // pred_fallthru
          _
        // Predicated region
        $region49: #{tpu_custom_call.1} parent=35 // pred_check
          %p775 = pneg %p121
        $region50: #{tpu_custom_call.1} parent=35 // pred_check_branch
          %777 = sbr.rel (%p775) target = $region52
        $region51: #{tpu_custom_call.1} parent=35 // pred_region
          %778 = dma.done [#allocation4], 128
        $region52: #{tpu_custom_call.1} parent=35 // pred_fallthru
          _
        // Predicated region
        $region53: #{tpu_custom_call.1} parent=35 // pred_check
          %p779 = pneg %p142
        $region54: #{tpu_custom_call.1} parent=35 // pred_check_branch
          %781 = sbr.rel (%p779) target = $region56
        $region55: #{tpu_custom_call.1} parent=35 // pred_region
          %782 = dma.done [#allocation6], 128
        $region56: #{tpu_custom_call.1} parent=35 // pred_fallthru
          _
      $region36: #{tpu_custom_call.1} parent=5 // pred_fallthru
        _
      %p783 = scmp.le.s32.totalorder 2, %s14
      // Predicated region
      $region57: #{tpu_custom_call.1} parent=5 // pred_check
        %p784 = pneg %p783
      $region58: #{tpu_custom_call.1} parent=5 // pred_check_branch
        %786 = sbr.rel (%p784) target = $region60
      $region59: #{tpu_custom_call.1} parent=5 // pred_region
        %s787 = ssub.s32 %s14, 2
      $region60: #{tpu_custom_call.1} parent=5 // pred_fallthru
        _
    $region6: #{tpu_custom_call.1} parent=1 // loop_footer
      %s18 = sadd.s32 1, %s14
    $region7: #{tpu_custom_call.1} parent=1 // loop_footer_branch
      %13 = sbr.rel target = $region3
    $region8: #{tpu_custom_call.1} parent=1 // loop_exit
      _
    %788 = vsyncpa [#allocation4], 1
    %s789 = scalar_lea.sflag [#allocation4], 1
    %790 = vsyncpa %s789, 1
    %791 = vsyncpa [#allocation6], 1

</llo_original>
